<compile_context>
chip_gen: v5e
topology: v5e:2x2
jax: 0.10.0
libtpu: 0.0.40
codegen_flags: <defaults>
</compile_context>

<pallas_src>
import jax
import jax.numpy as jnp
from jax.experimental import pallas as pl
from jax.experimental.pallas import tpu as pltpu


def _make_se_kernel(Cr, use_mxu):
    """Build the SE kernel body. Cr and the MXU/VPU choice are static."""

    def se_kernel(x_ref, w_ref, o_ref):
        # x_ref: (B, C, HW) — C on sublanes, HW on the fast lane axis.
        x = x_ref[...]
        xf = x.astype(jnp.float32)                       # f32 compute (v5e-safe)

        # Fused weight: [:, :Cr] = w1^T / HW, [:, Cr:] = w2 (native layout).
        w = w_ref[...]                                   # (C, 2*Cr) f32
        w1t = w[:, :Cr]                                  # (C, Cr)
        w2 = w[:, Cr:]                                   # (C, Cr)

        # ---- squeeze: global pool over the spatial (lane) axis ----
        # 1/HW is folded into w1t, so a plain sum suffices.
        pooled = jnp.sum(xf, axis=-1, keepdims=True)     # (B, C, 1)

        if use_mxu:
            # Production-width excitation: two tiny matmuls on the MXU.
            p2 = pooled[:, :, 0]                         # (B, C)
            h = jnp.maximum(
                jnp.dot(p2, w1t, preferred_element_type=jnp.float32), 0.0)   # (B, Cr)
            g = jax.lax.dot_general(
                h, w2, (((1,), (1,)), ((), ())),
                preferred_element_type=jnp.float32)      # (B, C)
            gate = jax.nn.sigmoid(g)[:, :, None]         # (B, C, 1)
        else:
            # Tiny excitation (C*Cr ~ 64 MACs): VPU broadcast-mul + reduce,
            # keeping C on sublanes end-to-end (no MXU latency, no gate
            # relayout before the final lane broadcast).
            h = jnp.sum(w1t[None, :, :] * pooled, axis=1, keepdims=True)     # (B, 1, Cr)
            h = jnp.maximum(h, 0.0)
            g = jnp.sum(w2[None, :, :] * h, axis=-1, keepdims=True)          # (B, C, 1)
            gate = jax.nn.sigmoid(g)

        # ---- scale: per-channel gate broadcast over spatial lanes ----
        o_ref[...] = (xf * gate).astype(o_ref.dtype)     # (B, C, HW)

    return se_kernel


def prepare_se_weights(w1, w2, hw):
    """One-time weight prep (do this at weight-load time, NOT per forward).

    w1: (C//r, C), w2: (C, C//r)  — PyTorch nn.Linear (out_feat, in_feat) layout.
    Returns a single fused (C, 2*Cr) f32 array:
      [:, :Cr] = w1^T / (H*W)   (transpose hoisted, pooling mean folded in)
      [:, Cr:] = w2             (native layout, no transpose needed)
    """
    Cr, C = w1.shape
    assert w2.shape == (C, Cr)
    w1t_scaled = (w1.T.astype(jnp.float32)) * (1.0 / float(hw))   # (C, Cr)
    return jnp.concatenate([w1t_scaled, w2.astype(jnp.float32)], axis=1)


def se_block(x, w_comb, *, donate_input=False, mxu_threshold=4096):
    """SEBlock forward. x: (B, C, H, W); w_comb: (C, 2*Cr) from prepare_se_weights."""
    B, C, H, W = x.shape
    HW = H * W
    assert w_comb.shape[0] == C and w_comb.shape[1] % 2 == 0
    Cr = w_comb.shape[1] // 2

    x3 = x.reshape(B, C, HW)
    use_mxu = (C * Cr) >= mxu_threshold

    itemsize = jnp.dtype(x.dtype).itemsize
    cost = pl.CostEstimate(
        flops=2 * B * C * HW + 4 * B * C * Cr,           # pool + scale + 2 tiny linears
        transcendentals=B * C,                           # sigmoid
        bytes_accessed=2 * B * C * HW * itemsize + 2 * C * Cr * 4,
    )

    extra = {}
    if donate_input:
        # Safe with grid=(1,): the whole input block is loaded before writeback.
        extra["input_output_aliases"] = {0: 0}

    out = pl.pallas_call(
        _make_se_kernel(Cr, use_mxu),
        out_shape=jax.ShapeDtypeStruct((B, C, HW), x.dtype),
        grid=(1,),  # single block: whole problem fits in VMEM, no per-step overhead
        in_specs=[
            pl.BlockSpec((B, C, HW), lambda i: (0, 0, 0)),   # full input, one block
            pl.BlockSpec((C, 2 * Cr), lambda i: (0, 0)),     # fused weights, resident
        ],
        out_specs=pl.BlockSpec((B, C, HW), lambda i: (0, 0, 0)),
        compiler_params=pltpu.CompilerParams(
            dimension_semantics=("arbitrary",)),
        cost_estimate=cost,
        **extra,
    )(x3, w_comb)
    return out.reshape(B, C, H, W)


def se_block_ref(x, w1, w2):
    """Pure-JAX reference matching the PyTorch SEBlock forward."""
    b, c, _, _ = x.shape
    y = jnp.mean(x, axis=(2, 3))                  # AdaptiveAvgPool2d(1) + view(b, c)
    y = jnp.maximum(y @ w1.T, 0.0)                # Linear(C -> C//r, no bias) + ReLU
    y = jax.nn.sigmoid(y @ w2.T)                  # Linear(C//r -> C, no bias) + Sigmoid
    return x * y[:, :, None, None]                # expand_as + multiply


if __name__ == "__main__":
    # Small shapes consistent with SEBlock(channel=32, reduction=16)
    B, C, H, W = 2, 32, 16, 16
    reduction = 16
    Cr = C // reduction  # 2

    key = jax.random.PRNGKey(0)
    kx, kw1, kw2 = jax.random.split(key, 3)
    x = jax.random.normal(kx, (B, C, H, W), dtype=jnp.float32)
    # nn.Linear weight layout: (out_features, in_features)
    w1 = jax.random.normal(kw1, (Cr, C), dtype=jnp.float32) * (1.0 / jnp.sqrt(C))
    w2 = jax.random.normal(kw2, (C, Cr), dtype=jnp.float32) * (1.0 / jnp.sqrt(Cr))

    # One-time weight prep (hoisted out of the per-call hot path).
    w_comb = prepare_se_weights(w1, w2, H * W)

    out = se_block(x, w_comb)
    out = jax.block_until_ready(out)

    ref = se_block_ref(x, w1, w2)
    assert out.shape == (B, C, H, W)
    assert jnp.allclose(out, ref, atol=1e-5, rtol=1e-5)

    print("KERNEL_OK")
</pallas_src>

<mosaic_0001>
module attributes {stable_mosaic.version = 11 : i64} {
  func.func @se_kernel(%arg0: i32, %arg1: memref<2x32x256xf32, #tpu.memory_space<vmem>>, %arg2: memref<32x4xf32, #tpu.memory_space<vmem>>, %arg3: memref<2x32x256xf32, #tpu.memory_space<vmem>>) attributes {dimension_semantics = [#tpu.dimension_semantics<arbitrary>], iteration_bounds = array<i64: 1>, scalar_prefetch = 0 : i64, scratch_operands = 0 : i64, tpu.core_type = #tpu.core_type<tc>, window_params = [{pipeline_mode = #tpu.pipeline_mode<synchronous>, transform_indices = @transform_0, window_bounds = array<i64: 2, 32, 256>}, {pipeline_mode = #tpu.pipeline_mode<synchronous>, transform_indices = @transform_1, window_bounds = array<i64: 32, 4>}, {pipeline_mode = #tpu.pipeline_mode<synchronous>, transform_indices = @transform_2, window_bounds = array<i64: 2, 32, 256>}]} {
    %c0 = arith.constant 0 : index
    %c0_0 = arith.constant 0 : index
    %c0_1 = arith.constant 0 : index
    %0 = vector.load %arg1[%c0, %c0_0, %c0_1] : memref<2x32x256xf32, #tpu.memory_space<vmem>>, vector<2x32x256xf32>
    %c0_2 = arith.constant 0 : index
    %c0_3 = arith.constant 0 : index
    %1 = vector.load %arg2[%c0_2, %c0_3] : memref<32x4xf32, #tpu.memory_space<vmem>>, vector<32x4xf32>
    %2 = vector.extract_strided_slice %1 {offsets = [0, 0], sizes = [32, 2], strides = [1, 1]} : vector<32x4xf32> to vector<32x2xf32>
    %3 = vector.extract_strided_slice %1 {offsets = [0, 2], sizes = [32, 2], strides = [1, 1]} : vector<32x4xf32> to vector<32x2xf32>
    %cst = arith.constant dense<0.000000e+00> : vector<2x32xf32>
    %4 = vector.multi_reduction <add>, %0, %cst [2] : vector<2x32x256xf32> to vector<2x32xf32>
    %5 = vector.shape_cast %4 : vector<2x32xf32> to vector<2x32x1xf32>
    %6 = vector.shape_cast %2 : vector<32x2xf32> to vector<1x32x2xf32>
    %7 = vector.broadcast %6 : vector<1x32x2xf32> to vector<2x32x2xf32>
    %8 = vector.broadcast %5 : vector<2x32x1xf32> to vector<2x32x2xf32>
    %9 = arith.mulf %7, %8 : vector<2x32x2xf32>
    %cst_4 = arith.constant dense<0.000000e+00> : vector<2x2xf32>
    %10 = vector.multi_reduction <add>, %9, %cst_4 [1] : vector<2x32x2xf32> to vector<2x2xf32>
    %11 = vector.shape_cast %10 : vector<2x2xf32> to vector<2x1x2xf32>
    %cst_5 = arith.constant 0.000000e+00 : f32
    %12 = vector.broadcast %cst_5 : f32 to vector<2x1x2xf32>
    %13 = arith.maximumf %11, %12 : vector<2x1x2xf32>
    %14 = vector.shape_cast %3 : vector<32x2xf32> to vector<1x32x2xf32>
    %15 = vector.broadcast %14 : vector<1x32x2xf32> to vector<2x32x2xf32>
    %16 = vector.broadcast %13 : vector<2x1x2xf32> to vector<2x32x2xf32>
    %17 = arith.mulf %15, %16 : vector<2x32x2xf32>
    %cst_6 = arith.constant dense<0.000000e+00> : vector<2x32xf32>
    %18 = vector.multi_reduction <add>, %17, %cst_6 [2] : vector<2x32x2xf32> to vector<2x32xf32>
    %19 = vector.shape_cast %18 : vector<2x32xf32> to vector<2x32x1xf32>
    %20 = arith.negf %19 : vector<2x32x1xf32>
    %21 = math.exp %20 : vector<2x32x1xf32>
    %cst_7 = arith.constant 1.000000e+00 : f32
    %22 = vector.broadcast %cst_7 : f32 to vector<2x32x1xf32>
    %23 = arith.addf %22, %21 : vector<2x32x1xf32>
    %24 = arith.divf %22, %23 : vector<2x32x1xf32>
    %25 = vector.broadcast %24 : vector<2x32x1xf32> to vector<2x32x256xf32>
    %26 = arith.mulf %0, %25 : vector<2x32x256xf32>
    %c0_8 = arith.constant 0 : index
    %c0_9 = arith.constant 0 : index
    %c0_10 = arith.constant 0 : index
    %27 = vector.load %arg3[%c0_8, %c0_9, %c0_10] : memref<2x32x256xf32, #tpu.memory_space<vmem>>, vector<2x32x256xf32>
    tpu.vector_store %arg3[%c0_8, %c0_9, %c0_10], %26 {strides = array<i32>} : memref<2x32x256xf32, #tpu.memory_space<vmem>>, vector<2x32x256xf32>,
    return
  }
  func.func @transform_0(%arg0: i32) -> (i32, i32, i32) {
    %c0_i32 = arith.constant 0 : i32
    %c0_i32_0 = arith.constant 0 : i32
    %c0_i32_1 = arith.constant 0 : i32
    %c0_i32_2 = arith.constant 0 : i32
    return %c0_i32, %c0_i32_0, %c0_i32_1 : i32, i32, i32
  }
  func.func @transform_1(%arg0: i32) -> (i32, i32) {
    %c0_i32 = arith.constant 0 : i32
    %c0_i32_0 = arith.constant 0 : i32
    %c0_i32_1 = arith.constant 0 : i32
    return %c0_i32, %c0_i32_0 : i32, i32
  }
  func.func @transform_2(%arg0: i32) -> (i32, i32, i32) {
    %c0_i32 = arith.constant 0 : i32
    %c0_i32_0 = arith.constant 0 : i32
    %c0_i32_1 = arith.constant 0 : i32
    %c0_i32_2 = arith.constant 0 : i32
    return %c0_i32, %c0_i32_0, %c0_i32_1 : i32, i32, i32
  }
}

</mosaic_0001>

<llo_original>
// kernel: tpu_custom_call.1
$region0: #{tpu_custom_call.1}
  #allocation0 [shape = 'u32[]', space=smem, size = 0x4, offset = 0x4, fixed_abs, tag = 'smem constant byte address 0x4 - core index']
  #allocation1 [shape = 'u32[72,128]{1,0:T(1,128)}', space=vmem, size = 0x9000, scoped, tag = 'internal scratch']
  %s0 = inlined_call_operand.hbm [shape: f32[2,32,256], index: 0, kind: input, shape index: {}]
  %s1 = inlined_call_operand.vmem [shape: f32[32,4], index: 1, kind: input, shape index: {}]
  %s2 = inlined_call_operand.hbm [shape: f32[2,32,256], index: 2, kind: output, shape index: {}]
  %s3 = sld [smem:[#allocation0]]
  $region22: #{tpu_custom_call.1} parent=0
    _
  %s5 = ssub.s32 1, %s3
  %s6 = scalar_select 0, %s5, %s3
  $region1: #{tpu_custom_call.1} parent=0
    #allocation2 [shape = 'u8[65536]{0}', space=vmem, size = 0x10000, scoped, tag = 'input window, operand 0, single buffered']
    #allocation3 [shape = 's32[1]{0}', space=sflag, size = 0x4, scoped, tag = 'scoped memory for tpu_custom_call.1']
    #allocation4 [shape = 's32[1]{0}', space=sflag, size = 0x4, scoped, tag = 'scoped memory for tpu_custom_call.1']
    #allocation5 [shape = 'u8[65536]{0}', space=vmem, size = 0x10000, scoped, tag = 'output window, operand 0, single buffered']
    %7 = vsyncpa [#allocation3], 0
    %8 = vsyncpa [#allocation4], 0
    // Predicated region
    $region2: #{tpu_custom_call.1} parent=1 // pred_check
      _
    $region3: #{tpu_custom_call.1} parent=1 // pred_check_branch
      %10 = sbr.rel (0) target = $region5
    $region4: #{tpu_custom_call.1} parent=1 // pred_region
      %12 = vsyncadd [#allocation3], 0
      %s13 = sshll.u32 %s0, 4
      %s14 = int_to_ptr.hbm [resolvable:$true] %s13
      %s15 = sshll.u32 [#allocation2], 4
      %s16 = int_to_ptr.vmem [resolvable:$true] %s15
      %21 = dma.hbm_to_vmem [thread:$0]  %s14, 2048, %s16, [#allocation3], 256, 256, 16
    $region5: #{tpu_custom_call.1} parent=1 // pred_fallthru
      _
    // Predicated region
    $region6: #{tpu_custom_call.1} parent=1 // pred_check
      _
    $region7: #{tpu_custom_call.1} parent=1 // pred_check_branch
      %23 = sbr.rel (0) target = $region9
    $region8: #{tpu_custom_call.1} parent=1 // pred_region
      _
    $region9: #{tpu_custom_call.1} parent=1 // pred_fallthru
      _
    // Predicated region
    $region10: #{tpu_custom_call.1} parent=1 // pred_check
      _
    $region11: #{tpu_custom_call.1} parent=1 // pred_check_branch
      %25 = sbr.rel (0) target = $region13
    $region12: #{tpu_custom_call.1} parent=1 // pred_region
      %27 = dma.done [#allocation3], 2048
    $region13: #{tpu_custom_call.1} parent=1 // pred_fallthru
      _
    %v28 = vld [vmem:[#allocation2] sm:$0xff]
    %v29 = vld [vmem:[#allocation2 + $0x8] sm:$0xff]
    %v30 = vld [vmem:[#allocation2 + $0x10] sm:$0xff]
    %v31 = vld [vmem:[#allocation2 + $0x18] sm:$0xff]
    %v32 = vld [vmem:[#allocation2 + $0x20] sm:$0xff]
    %v33 = vld [vmem:[#allocation2 + $0x28] sm:$0xff]
    %v34 = vld [vmem:[#allocation2 + $0x30] sm:$0xff]
    %v35 = vld [vmem:[#allocation2 + $0x38] sm:$0xff]
    %v36 = vld [vmem:[#allocation2 + $0x40] sm:$0xff]
    %v37 = vld [vmem:[#allocation2 + $0x48] sm:$0xff]
    %v38 = vld [vmem:[#allocation2 + $0x50] sm:$0xff]
    %v39 = vld [vmem:[#allocation2 + $0x58] sm:$0xff]
    %v40 = vld [vmem:[#allocation2 + $0x60] sm:$0xff]
    %v41 = vld [vmem:[#allocation2 + $0x68] sm:$0xff]
    %v42 = vld [vmem:[#allocation2 + $0x70] sm:$0xff]
    %v43 = vld [vmem:[#allocation2 + $0x78] sm:$0xff]
    %v44 = vld [vmem:[%s1] sm:$0xff]
    %v45 = vld [vmem:[%s1 + $0x8] sm:$0xff]
    %v46 = vld [vmem:[%s1 + $0x10] sm:$0xff]
    %v47 = vld [vmem:[%s1 + $0x18] sm:$0xff]
    %v48 = vadd.f32 %v28, %v29
    %49 = vadd.xlane.f32.xlu0 %v48
    %v50 = vpop.xlane.xlu0 %49
    %v51 = vadd.f32 %v30, %v31
    %52 = vadd.xlane.f32.xlu0 %v51
    %v53 = vpop.xlane.xlu0 %52
    %v54 = vadd.f32 %v32, %v33
    %55 = vadd.xlane.f32.xlu0 %v54
    %v56 = vpop.xlane.xlu0 %55
    %v57 = vadd.f32 %v34, %v35
    %58 = vadd.xlane.f32.xlu0 %v57
    %v59 = vpop.xlane.xlu0 %58
    %v60 = vadd.f32 %v36, %v37
    %61 = vadd.xlane.f32.xlu0 %v60
    %v62 = vpop.xlane.xlu0 %61
    %v63 = vadd.f32 %v38, %v39
    %64 = vadd.xlane.f32.xlu0 %v63
    %v65 = vpop.xlane.xlu0 %64
    %v66 = vadd.f32 %v40, %v41
    %67 = vadd.xlane.f32.xlu0 %v66
    %v68 = vpop.xlane.xlu0 %67
    %v69 = vadd.f32 %v42, %v43
    %70 = vadd.xlane.f32.xlu0 %v69
    %v71 = vpop.xlane.xlu0 %70
    %v72 = vmul.f32 %v44, %v50
    %v73 = vmul.f32 %v45, %v53
    %v74 = vmul.f32 %v46, %v56
    %v75 = vmul.f32 %v47, %v59
    %v76 = vmul.f32 %v44, %v62
    %v77 = vmul.f32 %v45, %v65
    %v78 = vmul.f32 %v46, %v68
    %v79 = vmul.f32 %v47, %v71
    %vm80 = vcmask 15360
    %v81 = vsel %vm80, %v72, 0.0
    %v82 = vsel %vm80, %v73, 0.0
    %v83 = vadd.f32 %v81, %v82
    %v84 = vsel %vm80, %v74, 0.0
    %v85 = vadd.f32 %v83, %v84
    %v86 = vsel %vm80, %v75, 0.0
    %v87 = vadd.f32 %v85, %v86
    %v88 = vrot.slane %v87, 4
    %v89 = vadd.f32 %v87, %v88
    %v90 = vrot.slane %v89, 2
    %v91 = vadd.f32 %v89, %v90
    %v92 = vrot.slane %v91, 1
    %v93 = vadd.f32 %v91, %v92
    %v94 = vsel %vm80, %v76, 0.0
    %v95 = vsel %vm80, %v77, 0.0
    %v96 = vadd.f32 %v94, %v95
    %v97 = vsel %vm80, %v78, 0.0
    %v98 = vadd.f32 %v96, %v97
    %v99 = vsel %vm80, %v79, 0.0
    %v100 = vadd.f32 %v98, %v99
    %v101 = vrot.slane %v100, 4
    %v102 = vadd.f32 %v100, %v101
    %v103 = vrot.slane %v102, 2
    %v104 = vadd.f32 %v102, %v103
    %v105 = vrot.slane %v104, 1
    %v106 = vadd.f32 %v104, %v105
    %v107 = vmax.f32 %v93, 0.0
    %v108 = vmax.f32 %v106, 0.0
    %111 = vrot.lane.b32.xlu0 %v107, 2
    %v112 = vpop.permute.xlu0 %111
    %113 = vrot.lane.b32.xlu0 %v108, 2
    %v114 = vpop.permute.xlu0 %113
    %v117 = vmul.f32 %v44, %v112
    %v118 = vmul.f32 %v45, %v112
    %v119 = vmul.f32 %v46, %v112
    %v120 = vmul.f32 %v47, %v112
    %v121 = vmul.f32 %v44, %v114
    %v122 = vmul.f32 %v45, %v114
    %v123 = vmul.f32 %v46, %v114
    %v124 = vmul.f32 %v47, %v114
    %133 = vrot.lane.b32.xlu0 %v117, 126
    %v134 = vpop.permute.xlu0 %133
    %135 = vrot.lane.b32.xlu0 %v118, 126
    %v136 = vpop.permute.xlu0 %135
    %137 = vrot.lane.b32.xlu0 %v119, 126
    %v138 = vpop.permute.xlu0 %137
    %139 = vrot.lane.b32.xlu0 %v120, 126
    %v140 = vpop.permute.xlu0 %139
    %141 = vrot.lane.b32.xlu0 %v121, 126
    %v142 = vpop.permute.xlu0 %141
    %143 = vrot.lane.b32.xlu0 %v122, 126
    %v144 = vpop.permute.xlu0 %143
    %145 = vrot.lane.b32.xlu0 %v123, 126
    %v146 = vpop.permute.xlu0 %145
    %147 = vrot.lane.b32.xlu0 %v124, 126
    %v148 = vpop.permute.xlu0 %147
    %v157 = vsel %vm80, %v134, 0.0
    %158 = vadd.xlane.f32.xlu0 %v157
    %v159 = vpop.xlane.xlu0 %158
    %v160 = vsel %vm80, %v136, 0.0
    %161 = vadd.xlane.f32.xlu0 %v160
    %v162 = vpop.xlane.xlu0 %161
    %v163 = vsel %vm80, %v138, 0.0
    %164 = vadd.xlane.f32.xlu0 %v163
    %v165 = vpop.xlane.xlu0 %164
    %v166 = vsel %vm80, %v140, 0.0
    %167 = vadd.xlane.f32.xlu0 %v166
    %v168 = vpop.xlane.xlu0 %167
    %v169 = vsel %vm80, %v142, 0.0
    %170 = vadd.xlane.f32.xlu0 %v169
    %v171 = vpop.xlane.xlu0 %170
    %v172 = vsel %vm80, %v144, 0.0
    %173 = vadd.xlane.f32.xlu0 %v172
    %v174 = vpop.xlane.xlu0 %173
    %v175 = vsel %vm80, %v146, 0.0
    %176 = vadd.xlane.f32.xlu0 %v175
    %v177 = vpop.xlane.xlu0 %176
    %v178 = vsel %vm80, %v148, 0.0
    %179 = vadd.xlane.f32.xlu0 %v178
    %v180 = vpop.xlane.xlu0 %179
    %v181 = vxor.u32 %v159, 2147483648
    %v182 = vxor.u32 %v162, 2147483648
    %v183 = vxor.u32 %v165, 2147483648
    %v184 = vxor.u32 %v168, 2147483648
    %v185 = vxor.u32 %v171, 2147483648
    %v186 = vxor.u32 %v174, 2147483648
    %v187 = vxor.u32 %v177, 2147483648
    %v188 = vxor.u32 %v180, 2147483648
    %v189 = vmul.f32 %v181, 1.442695
    %v190 = vpow.pop %v189
    %v191 = vmul.f32 %v182, 1.442695
    %v192 = vpow.pop %v191
    %v193 = vmul.f32 %v183, 1.442695
    %v194 = vpow.pop %v193
    %v195 = vmul.f32 %v184, 1.442695
    %v196 = vpow.pop %v195
    %v197 = vmul.f32 %v185, 1.442695
    %v198 = vpow.pop %v197
    %v199 = vmul.f32 %v186, 1.442695
    %v200 = vpow.pop %v199
    %v201 = vmul.f32 %v187, 1.442695
    %v202 = vpow.pop %v201
    %v203 = vmul.f32 %v188, 1.442695
    %v204 = vpow.pop %v203
    %v205 = vadd.f32 %v190, 1.0
    %v206 = vadd.f32 %v192, 1.0
    %v207 = vadd.f32 %v194, 1.0
    %v208 = vadd.f32 %v196, 1.0
    %v209 = vadd.f32 %v198, 1.0
    %v210 = vadd.f32 %v200, 1.0
    %v211 = vadd.f32 %v202, 1.0
    %v212 = vadd.f32 %v204, 1.0
    %v213 = vrcp.pop %v205
    %v214 = vmul.f32 %v205, %v213
    %v215 = vsub.f32 1.0, %v214
    %v216 = vmul.f32 %v213, %v215
    %v217 = vadd.f32 %v213, %v216
    %vm218 = vweird.f32 %v205
    %vm219 = vweird.f32 %v213
    %vm220 = vmor %vm218, %vm219
    %v221 = vsel %vm220, %v213, %v217
    %v222 = vand.u32 2147483647, %v205
    %vm223 = vcmp.eq.f32.partialorder %v222, 8.507059e+37
    %v224 = vand.u32 %v205, 2147483648
    %v225 = vor.u32 1.1754944e-38, %v224
    %v226 = vsel %vm223, %v225, %v221
    %v227 = vmul.f32 1.0, %v226
    %v228 = vrcp.pop %v206
    %v229 = vmul.f32 %v206, %v228
    %v230 = vsub.f32 1.0, %v229
    %v231 = vmul.f32 %v228, %v230
    %v232 = vadd.f32 %v228, %v231
    %vm233 = vweird.f32 %v206
    %vm234 = vweird.f32 %v228
    %vm235 = vmor %vm233, %vm234
    %v236 = vsel %vm235, %v228, %v232
    %v237 = vand.u32 2147483647, %v206
    %vm238 = vcmp.eq.f32.partialorder %v237, 8.507059e+37
    %v239 = vand.u32 %v206, 2147483648
    %v240 = vor.u32 1.1754944e-38, %v239
    %v241 = vsel %vm238, %v240, %v236
    %v242 = vmul.f32 1.0, %v241
    %v243 = vrcp.pop %v207
    %v244 = vmul.f32 %v207, %v243
    %v245 = vsub.f32 1.0, %v244
    %v246 = vmul.f32 %v243, %v245
    %v247 = vadd.f32 %v243, %v246
    %vm248 = vweird.f32 %v207
    %vm249 = vweird.f32 %v243
    %vm250 = vmor %vm248, %vm249
    %v251 = vsel %vm250, %v243, %v247
    %v252 = vand.u32 2147483647, %v207
    %vm253 = vcmp.eq.f32.partialorder %v252, 8.507059e+37
    %v254 = vand.u32 %v207, 2147483648
    %v255 = vor.u32 1.1754944e-38, %v254
    %v256 = vsel %vm253, %v255, %v251
    %v257 = vmul.f32 1.0, %v256
    %v258 = vrcp.pop %v208
    %v259 = vmul.f32 %v208, %v258
    %v260 = vsub.f32 1.0, %v259
    %v261 = vmul.f32 %v258, %v260
    %v262 = vadd.f32 %v258, %v261
    %vm263 = vweird.f32 %v208
    %vm264 = vweird.f32 %v258
    %vm265 = vmor %vm263, %vm264
    %v266 = vsel %vm265, %v258, %v262
    %v267 = vand.u32 2147483647, %v208
    %vm268 = vcmp.eq.f32.partialorder %v267, 8.507059e+37
    %v269 = vand.u32 %v208, 2147483648
    %v270 = vor.u32 1.1754944e-38, %v269
    %v271 = vsel %vm268, %v270, %v266
    %v272 = vmul.f32 1.0, %v271
    %v273 = vrcp.pop %v209
    %v274 = vmul.f32 %v209, %v273
    %v275 = vsub.f32 1.0, %v274
    %v276 = vmul.f32 %v273, %v275
    %v277 = vadd.f32 %v273, %v276
    %vm278 = vweird.f32 %v209
    %vm279 = vweird.f32 %v273
    %vm280 = vmor %vm278, %vm279
    %v281 = vsel %vm280, %v273, %v277
    %v282 = vand.u32 2147483647, %v209
    %vm283 = vcmp.eq.f32.partialorder %v282, 8.507059e+37
    %v284 = vand.u32 %v209, 2147483648
    %v285 = vor.u32 1.1754944e-38, %v284
    %v286 = vsel %vm283, %v285, %v281
    %v287 = vmul.f32 1.0, %v286
    %v288 = vrcp.pop %v210
    %v289 = vmul.f32 %v210, %v288
    %v290 = vsub.f32 1.0, %v289
    %v291 = vmul.f32 %v288, %v290
    %v292 = vadd.f32 %v288, %v291
    %vm293 = vweird.f32 %v210
    %vm294 = vweird.f32 %v288
    %vm295 = vmor %vm293, %vm294
    %v296 = vsel %vm295, %v288, %v292
    %v297 = vand.u32 2147483647, %v210
    %vm298 = vcmp.eq.f32.partialorder %v297, 8.507059e+37
    %v299 = vand.u32 %v210, 2147483648
    %v300 = vor.u32 1.1754944e-38, %v299
    %v301 = vsel %vm298, %v300, %v296
    %v302 = vmul.f32 1.0, %v301
    %v303 = vrcp.pop %v211
    %v304 = vmul.f32 %v211, %v303
    %v305 = vsub.f32 1.0, %v304
    %v306 = vmul.f32 %v303, %v305
    %v307 = vadd.f32 %v303, %v306
    %vm308 = vweird.f32 %v211
    %vm309 = vweird.f32 %v303
    %vm310 = vmor %vm308, %vm309
    %v311 = vsel %vm310, %v303, %v307
    %v312 = vand.u32 2147483647, %v211
    %vm313 = vcmp.eq.f32.partialorder %v312, 8.507059e+37
    %v314 = vand.u32 %v211, 2147483648
    %v315 = vor.u32 1.1754944e-38, %v314
    %v316 = vsel %vm313, %v315, %v311
    %v317 = vmul.f32 1.0, %v316
    %v318 = vrcp.pop %v212
    %v319 = vmul.f32 %v212, %v318
    %v320 = vsub.f32 1.0, %v319
    %v321 = vmul.f32 %v318, %v320
    %v322 = vadd.f32 %v318, %v321
    %vm323 = vweird.f32 %v212
    %vm324 = vweird.f32 %v318
    %vm325 = vmor %vm323, %vm324
    %v326 = vsel %vm325, %v318, %v322
    %v327 = vand.u32 2147483647, %v212
    %vm328 = vcmp.eq.f32.partialorder %v327, 8.507059e+37
    %v329 = vand.u32 %v212, 2147483648
    %v330 = vor.u32 1.1754944e-38, %v329
    %v331 = vsel %vm328, %v330, %v326
    %v332 = vmul.f32 1.0, %v331
    %v333 = vmul.f32 %v28, %v227
    %v334 = vmul.f32 %v29, %v227
    %v335 = vmul.f32 %v30, %v242
    %v336 = vmul.f32 %v31, %v242
    %v337 = vmul.f32 %v32, %v257
    %v338 = vmul.f32 %v33, %v257
    %v339 = vmul.f32 %v34, %v272
    %v340 = vmul.f32 %v35, %v272
    %v341 = vmul.f32 %v36, %v287
    %v342 = vmul.f32 %v37, %v287
    %v343 = vmul.f32 %v38, %v302
    %v344 = vmul.f32 %v39, %v302
    %v345 = vmul.f32 %v40, %v317
    %v346 = vmul.f32 %v41, %v317
    %v347 = vmul.f32 %v42, %v332
    %v348 = vmul.f32 %v43, %v332
    %349 = vst [vmem:[#allocation5] sm:$0xff] %v333
    %350 = vst [vmem:[#allocation5 + $0x8] sm:$0xff] %v334
    %351 = vst [vmem:[#allocation5 + $0x10] sm:$0xff] %v335
    %352 = vst [vmem:[#allocation5 + $0x18] sm:$0xff] %v336
    %353 = vst [vmem:[#allocation5 + $0x20] sm:$0xff] %v337
    %354 = vst [vmem:[#allocation5 + $0x28] sm:$0xff] %v338
    %355 = vst [vmem:[#allocation5 + $0x30] sm:$0xff] %v339
    %356 = vst [vmem:[#allocation5 + $0x38] sm:$0xff] %v340
    %357 = vst [vmem:[#allocation5 + $0x40] sm:$0xff] %v341
    %358 = vst [vmem:[#allocation5 + $0x48] sm:$0xff] %v342
    %359 = vst [vmem:[#allocation5 + $0x50] sm:$0xff] %v343
    %360 = vst [vmem:[#allocation5 + $0x58] sm:$0xff] %v344
    %361 = vst [vmem:[#allocation5 + $0x60] sm:$0xff] %v345
    %362 = vst [vmem:[#allocation5 + $0x68] sm:$0xff] %v346
    %363 = vst [vmem:[#allocation5 + $0x70] sm:$0xff] %v347
    %364 = vst [vmem:[#allocation5 + $0x78] sm:$0xff] %v348
    // Predicated region
    $region14: #{tpu_custom_call.1} parent=1 // pred_check
      _
    $region15: #{tpu_custom_call.1} parent=1 // pred_check_branch
      %366 = sbr.rel (0) target = $region17
    $region16: #{tpu_custom_call.1} parent=1 // pred_region
      %368 = vsyncadd [#allocation4], 0
      %s369 = sshll.u32 [#allocation5], 4
      %s370 = int_to_ptr.vmem [resolvable:$true] %s369
      %s371 = sshll.u32 %s2, 4
      %s372 = int_to_ptr.hbm [resolvable:$true] %s371
      %377 = dma.vmem_to_hbm [thread:$0]  %s370, 2048, %s372, [#allocation4], 256, 256, 16
    $region17: #{tpu_custom_call.1} parent=1 // pred_fallthru
      _
    // Predicated region
    $region18: #{tpu_custom_call.1} parent=1 // pred_check
      _
    $region19: #{tpu_custom_call.1} parent=1 // pred_check_branch
      %379 = sbr.rel (0) target = $region21
    $region20: #{tpu_custom_call.1} parent=1 // pred_region
      %381 = dma.done [#allocation4], 2048
    $region21: #{tpu_custom_call.1} parent=1 // pred_fallthru
      _
    %382 = vsyncpa [#allocation3], 1
    %383 = vsyncpa [#allocation4], 1

</llo_original>
